<compile_context>
chip_gen: v7x
topology: tpu7x:2x2x1
jax: 0.10.0
libtpu: 0.0.40
codegen_flags: <defaults>
</compile_context>

<pallas_src>
import math
from functools import partial

import jax
import jax.numpy as jnp
from jax.experimental import pallas as pl
from jax.experimental.pallas import tpu as pltpu

LOG_STD_MAX = 2.0
LOG_STD_MIN = -4.0
# NOTE: the original module uses np.log(np.sqrt(2) * np.pi); keep it for parity.
_LOG_CONST = math.log(math.sqrt(2.0) * math.pi)


def _make_kernel(H: int, P: int, deterministic: bool):
    """Build the policy-head kernel for fixed (H, P, deterministic)."""

    def kernel(obs_ref, w1_ref, w2_ref, wh_ref, aux_ref, *rest):
        if deterministic:
            param_ref, logp_ref = rest
            noise = None
        else:
            noise_ref, param_ref, logp_ref = rest
            noise = noise_ref[...]

        # --- unpack the packed aux row (static slices, single DMA'd operand) ---
        b1 = aux_ref[:, 0:H]
        b2 = aux_ref[:, H:2 * H]
        bh = aux_ref[:, 2 * H:2 * H + 2 * P]
        scale = aux_ref[:, 2 * H + 2 * P:2 * H + 3 * P]
        loc = aux_ref[:, 2 * H + 3 * P:2 * H + 4 * P]

        obs = obs_ref[...]

        # --- MLP hot path (MXU): two hidden layers + ONE fused head matmul ---
        h1 = jnp.maximum(
            jnp.dot(obs, w1_ref[...], preferred_element_type=jnp.float32) + b1, 0.0)
        h2 = jnp.maximum(
            jnp.dot(h1, w2_ref[...], preferred_element_type=jnp.float32) + b2, 0.0)
        heads = jnp.dot(h2, wh_ref[...], preferred_element_type=jnp.float32) + bh

        mean = heads[:, :P]
        log_std = jnp.clip(heads[:, P:], LOG_STD_MIN, LOG_STD_MAX)

        # --- sampling / log-prob (VPU + EUP), divide-free ---
        if deterministic:
            action_pre = mean
            # z == 0  ->  gaussian term is just -log_std - C ; no exp needed.
            log_prob = -log_std - _LOG_CONST
        else:
            std = jnp.exp(log_std)
            action_pre = mean + std * noise
            # z == noise exactly, no subtract/divide round trip.
            log_prob = -0.5 * noise * noise - log_std - _LOG_CONST

        action = jnp.tanh(action_pre)
        log_prob = log_prob - jnp.log(scale * (1.0 - action * action) + 1e-6)

        logp_ref[...] = jnp.sum(log_prob, axis=-1, keepdims=True)
        param_ref[...] = action * scale + loc

    return kernel


def mpc_sac_actor_forward(obs, params, noise, scale, loc, *,
                          deterministic=False, block_b=512):
    """Run the squashed-Gaussian policy head. Returns (param, log_prob).

    obs:   [B, D] float32
    noise: [B, P] float32 standard-normal (ignored when deterministic=True)
    """
    w1, b1, w2, b2, wm, bm, ws, bs = (
        params["w1"], params["b1"], params["w2"], params["b2"],
        params["wm"], params["bm"], params["ws"], params["bs"],
    )
    B, D = obs.shape
    H = w1.shape[1]
    P = wm.shape[1]

    # Host-side fusion/packing (one-time, tiny).
    w_head = jnp.concatenate([wm, ws], axis=1)                 # [H, 2P]
    b_head = jnp.concatenate([bm, bs], axis=1)                 # [1, 2P]
    aux = jnp.concatenate([b1, b2, b_head, scale, loc], axis=1)  # [1, 2H+4P]
    A = aux.shape[1]

    # Batch tiling: full-batch block for small B, otherwise 512-row tiles
    # (multiple of 8 sublanes) so VMEM residency is bounded (v7x: 64 MiB).
    TB = B if B <= block_b else block_b
    n_blocks = pl.cdiv(B, TB)
    Bp = TB * n_blocks
    if Bp != B:
        pad = Bp - B
        obs = jnp.pad(obs, ((0, pad), (0, 0)))
        if not deterministic:
            noise = jnp.pad(noise, ((0, pad), (0, 0)))

    resident = lambda shape: pl.BlockSpec(shape, lambda i: (0, 0))
    in_specs = [
        pl.BlockSpec((TB, D), lambda i: (i, 0)),   # obs (tiled over batch)
        resident((D, H)),                          # w1   (stays in VMEM)
        resident((H, H)),                          # w2
        resident((H, 2 * P)),                      # fused head weights
        resident((1, A)),                          # packed biases/scale/loc
    ]
    inputs = [obs, w1, w2, w_head, aux]
    if not deterministic:
        in_specs.append(pl.BlockSpec((TB, P), lambda i: (i, 0)))
        inputs.append(noise)

    kernel = _make_kernel(H, P, deterministic)

    param_out, logp_out = pl.pallas_call(
        kernel,
        grid=(n_blocks,),
        in_specs=in_specs,
        out_specs=(
            pl.BlockSpec((TB, P), lambda i: (i, 0)),
            pl.BlockSpec((TB, 1), lambda i: (i, 0)),
        ),
        out_shape=(
            jax.ShapeDtypeStruct((Bp, P), jnp.float32),
            jax.ShapeDtypeStruct((Bp, 1), jnp.float32),
        ),
        compiler_params=pltpu.CompilerParams(
            dimension_semantics=("parallel",)),     # 2x TC sharding on v7x
    )(*inputs)

    if Bp != B:
        param_out = param_out[:B]
        logp_out = logp_out[:B]

    # TODO(synk): the downstream MPC solve (self.mpc(mpc_input, mpc_state) ->
    # u0/status/state_solution/stats) is an external iterative OCP solver with
    # no Pallas equivalent; only the policy head (param, log_prob) is computed.
    return param_out, logp_out


def _reference(obs, params, noise, scale, loc, deterministic=False):
    h1 = jnp.maximum(obs @ params["w1"] + params["b1"], 0.0)
    h2 = jnp.maximum(h1 @ params["w2"] + params["b2"], 0.0)
    mean = h2 @ params["wm"] + params["bm"]
    log_std = jnp.clip(h2 @ params["ws"] + params["bs"], LOG_STD_MIN, LOG_STD_MAX)
    std = jnp.exp(log_std)
    action_pre = mean if deterministic else mean + std * noise
    log_prob = -0.5 * ((action_pre - mean) / std) ** 2 - log_std - _LOG_CONST
    action = jnp.tanh(action_pre)
    log_prob = log_prob - jnp.log(scale * (1.0 - action**2) + 1e-6)
    log_prob = jnp.sum(log_prob, axis=-1, keepdims=True)
    param = action * scale + loc
    return param, log_prob


if __name__ == "__main__":
    key = jax.random.PRNGKey(0)
    B, D, H, P = 2, 16, 32, 4  # batch, obs features, hidden, param-space dim

    keys = jax.random.split(key, 12)
    obs = jax.random.normal(keys[0], (B, D), dtype=jnp.float32)
    noise = jax.random.normal(keys[1], (B, P), dtype=jnp.float32)

    def init_w(k, shape):
        fan_in = shape[0]
        return jax.random.normal(k, shape, dtype=jnp.float32) / jnp.sqrt(
            jnp.float32(fan_in))

    params = {
        "w1": init_w(keys[2], (D, H)),
        "b1": 0.01 * jnp.ones((1, H), jnp.float32),
        "w2": init_w(keys[3], (H, H)),
        "b2": 0.01 * jnp.ones((1, H), jnp.float32),
        "wm": init_w(keys[4], (H, P)),
        "bm": jnp.zeros((1, P), jnp.float32),
        "ws": init_w(keys[5], (H, P)),
        "bs": jnp.zeros((1, P), jnp.float32),
    }

    # param_space: low = -2, high = 3  ->  loc = 0.5, scale = 2.5 (per-dim)
    low = -2.0 * jnp.ones((P,), jnp.float32)
    high = 3.0 * jnp.ones((P,), jnp.float32)
    loc = ((high + low) / 2.0)[None, :]
    scale = ((high - low) / 2.0)[None, :]

    # Stochastic path
    param_out, logp_out = mpc_sac_actor_forward(
        obs, params, noise, scale, loc, deterministic=False)
    jax.block_until_ready((param_out, logp_out))
    ref_param, ref_logp = _reference(obs, params, noise, scale, loc, False)
    assert jnp.allclose(param_out, ref_param, atol=1e-5, rtol=1e-5)
    assert jnp.allclose(logp_out, ref_logp, atol=1e-4, rtol=1e-4)

    # Deterministic path (noise-free, exp-free branch)
    param_d, logp_d = mpc_sac_actor_forward(
        obs, params, noise, scale, loc, deterministic=True)
    jax.block_until_ready((param_d, logp_d))
    ref_param_d, ref_logp_d = _reference(obs, params, noise, scale, loc, True)
    assert jnp.allclose(param_d, ref_param_d, atol=1e-5, rtol=1e-5)
    assert jnp.allclose(logp_d, ref_logp_d, atol=1e-4, rtol=1e-4)

    print("KERNEL_OK")
</pallas_src>

<mosaic_0001>
module attributes {stable_mosaic.version = 11 : i64} {
  func.func @kernel(%arg0: i32, %arg1: memref<2x16xf32, #tpu.memory_space<vmem>>, %arg2: memref<16x32xf32, #tpu.memory_space<vmem>>, %arg3: memref<32x32xf32, #tpu.memory_space<vmem>>, %arg4: memref<32x8xf32, #tpu.memory_space<vmem>>, %arg5: memref<1x80xf32, #tpu.memory_space<vmem>>, %arg6: memref<2x4xf32, #tpu.memory_space<vmem>>, %arg7: memref<2x4xf32, #tpu.memory_space<vmem>>, %arg8: memref<2x1xf32, #tpu.memory_space<vmem>>) attributes {dimension_semantics = [#tpu.dimension_semantics<parallel>], iteration_bounds = array<i64: 1>, scalar_prefetch = 0 : i64, scratch_operands = 0 : i64, tpu.core_type = #tpu.core_type<tc>, window_params = [{transform_indices = @transform_0, window_bounds = array<i64: 2, 16>}, {pipeline_mode = #tpu.pipeline_mode<synchronous>, transform_indices = @transform_1, window_bounds = array<i64: 16, 32>}, {pipeline_mode = #tpu.pipeline_mode<synchronous>, transform_indices = @transform_2, window_bounds = array<i64: 32, 32>}, {pipeline_mode = #tpu.pipeline_mode<synchronous>, transform_indices = @transform_3, window_bounds = array<i64: 32, 8>}, {pipeline_mode = #tpu.pipeline_mode<synchronous>, transform_indices = @transform_4, window_bounds = array<i64: 1, 80>}, {transform_indices = @transform_5, window_bounds = array<i64: 2, 4>}, {transform_indices = @transform_6, window_bounds = array<i64: 2, 4>}, {transform_indices = @transform_7, window_bounds = array<i64: 2, 1>}]} {
    %c0 = arith.constant 0 : index
    %c0_0 = arith.constant 0 : index
    %0 = vector.load %arg6[%c0, %c0_0] : memref<2x4xf32, #tpu.memory_space<vmem>>, vector<2x4xf32>
    %c0_1 = arith.constant 0 : index
    %c0_2 = arith.constant 0 : index
    %1 = vector.load %arg5[%c0_1, %c0_2] : memref<1x80xf32, #tpu.memory_space<vmem>>, vector<1x32xf32>
    %c0_3 = arith.constant 0 : index
    %c32 = arith.constant 32 : index
    %2 = vector.load %arg5[%c0_3, %c32] : memref<1x80xf32, #tpu.memory_space<vmem>>, vector<1x32xf32>
    %c0_4 = arith.constant 0 : index
    %c64 = arith.constant 64 : index
    %3 = vector.load %arg5[%c0_4, %c64] : memref<1x80xf32, #tpu.memory_space<vmem>>, vector<1x8xf32>
    %c0_5 = arith.constant 0 : index
    %c72 = arith.constant 72 : index
    %4 = vector.load %arg5[%c0_5, %c72] : memref<1x80xf32, #tpu.memory_space<vmem>>, vector<1x4xf32>
    %c0_6 = arith.constant 0 : index
    %c76 = arith.constant 76 : index
    %5 = vector.load %arg5[%c0_6, %c76] : memref<1x80xf32, #tpu.memory_space<vmem>>, vector<1x4xf32>
    %c0_7 = arith.constant 0 : index
    %c0_8 = arith.constant 0 : index
    %6 = vector.load %arg1[%c0_7, %c0_8] : memref<2x16xf32, #tpu.memory_space<vmem>>, vector<2x16xf32>
    %c0_9 = arith.constant 0 : index
    %c0_10 = arith.constant 0 : index
    %7 = vector.load %arg2[%c0_9, %c0_10] : memref<16x32xf32, #tpu.memory_space<vmem>>, vector<16x32xf32>
    %cst = arith.constant dense<0.000000e+00> : vector<2x32xf32>
    %8 = tpu.matmul %6, %7, %cst {dimension_numbers = #tpu.dot_dimension_numbers<[1], [0], [0], [1], [0, 0, 1, 1], [], []>} : vector<2x16xf32>, vector<16x32xf32>, vector<2x32xf32> -> vector<2x32xf32>
    %9 = vector.broadcast %1 : vector<1x32xf32> to vector<2x32xf32>
    %10 = arith.addf %8, %9 : vector<2x32xf32>
    %cst_11 = arith.constant 0.000000e+00 : f32
    %11 = vector.broadcast %cst_11 : f32 to vector<2x32xf32>
    %12 = arith.maximumf %10, %11 : vector<2x32xf32>
    %c0_12 = arith.constant 0 : index
    %c0_13 = arith.constant 0 : index
    %13 = vector.load %arg3[%c0_12, %c0_13] : memref<32x32xf32, #tpu.memory_space<vmem>>, vector<32x32xf32>
    %cst_14 = arith.constant dense<0.000000e+00> : vector<2x32xf32>
    %14 = tpu.matmul %12, %13, %cst_14 {dimension_numbers = #tpu.dot_dimension_numbers<[1], [0], [0], [1], [0, 0, 1, 1], [], []>} : vector<2x32xf32>, vector<32x32xf32>, vector<2x32xf32> -> vector<2x32xf32>
    %15 = vector.broadcast %2 : vector<1x32xf32> to vector<2x32xf32>
    %16 = arith.addf %14, %15 : vector<2x32xf32>
    %cst_15 = arith.constant 0.000000e+00 : f32
    %17 = vector.broadcast %cst_15 : f32 to vector<2x32xf32>
    %18 = arith.maximumf %16, %17 : vector<2x32xf32>
    %c0_16 = arith.constant 0 : index
    %c0_17 = arith.constant 0 : index
    %19 = vector.load %arg4[%c0_16, %c0_17] : memref<32x8xf32, #tpu.memory_space<vmem>>, vector<32x8xf32>
    %cst_18 = arith.constant dense<0.000000e+00> : vector<2x8xf32>
    %20 = tpu.matmul %18, %19, %cst_18 {dimension_numbers = #tpu.dot_dimension_numbers<[1], [0], [0], [1], [0, 0, 1, 1], [], []>} : vector<2x32xf32>, vector<32x8xf32>, vector<2x8xf32> -> vector<2x8xf32>
    %21 = vector.broadcast %3 : vector<1x8xf32> to vector<2x8xf32>
    %22 = arith.addf %20, %21 : vector<2x8xf32>
    %23 = vector.extract_strided_slice %22 {offsets = [0, 0], sizes = [2, 4], strides = [1, 1]} : vector<2x8xf32> to vector<2x4xf32>
    %24 = vector.extract_strided_slice %22 {offsets = [0, 4], sizes = [2, 4], strides = [1, 1]} : vector<2x8xf32> to vector<2x4xf32>
    %cst_19 = arith.constant -4.000000e+00 : f32
    %cst_20 = arith.constant 2.000000e+00 : f32
    %25 = vector.broadcast %cst_19 : f32 to vector<2x4xf32>
    %26 = arith.maximumf %25, %24 : vector<2x4xf32>
    %27 = vector.broadcast %cst_20 : f32 to vector<2x4xf32>
    %28 = arith.minimumf %27, %26 : vector<2x4xf32>
    %29 = math.exp %28 : vector<2x4xf32>
    %30 = arith.mulf %29, %0 : vector<2x4xf32>
    %31 = arith.addf %23, %30 : vector<2x4xf32>
    %cst_21 = arith.constant -5.000000e-01 : f32
    %32 = vector.broadcast %cst_21 : f32 to vector<2x4xf32>
    %33 = arith.mulf %32, %0 : vector<2x4xf32>
    %34 = arith.mulf %33, %0 : vector<2x4xf32>
    %35 = arith.subf %34, %28 : vector<2x4xf32>
    %cst_22 = arith.constant 1.49130344 : f32
    %36 = vector.broadcast %cst_22 : f32 to vector<2x4xf32>
    %37 = arith.subf %35, %36 : vector<2x4xf32>
    %38 = math.tanh %31 : vector<2x4xf32>
    %39 = arith.mulf %38, %38 : vector<2x4xf32>
    %cst_23 = arith.constant 1.000000e+00 : f32
    %40 = vector.broadcast %cst_23 : f32 to vector<2x4xf32>
    %41 = arith.subf %40, %39 : vector<2x4xf32>
    %42 = vector.broadcast %4 : vector<1x4xf32> to vector<2x4xf32>
    %43 = arith.mulf %42, %41 : vector<2x4xf32>
    %cst_24 = arith.constant 9.99999997E-7 : f32
    %44 = vector.broadcast %cst_24 : f32 to vector<2x4xf32>
    %45 = arith.addf %43, %44 : vector<2x4xf32>
    %46 = math.log %45 : vector<2x4xf32>
    %47 = arith.subf %37, %46 : vector<2x4xf32>
    %cst_25 = arith.constant dense<0.000000e+00> : vector<2xf32>
    %48 = vector.multi_reduction <add>, %47, %cst_25 [1] : vector<2x4xf32> to vector<2xf32>
    %49 = vector.shape_cast %48 : vector<2xf32> to vector<2x1xf32>
    %c0_26 = arith.constant 0 : index
    %c0_27 = arith.constant 0 : index
    %50 = vector.load %arg8[%c0_26, %c0_27] : memref<2x1xf32, #tpu.memory_space<vmem>>, vector<2x1xf32>
    tpu.vector_store %arg8[%c0_26, %c0_27], %49 {strides = array<i32>} : memref<2x1xf32, #tpu.memory_space<vmem>>, vector<2x1xf32>,
    %51 = vector.broadcast %4 : vector<1x4xf32> to vector<2x4xf32>
    %52 = arith.mulf %38, %51 : vector<2x4xf32>
    %53 = vector.broadcast %5 : vector<1x4xf32> to vector<2x4xf32>
    %54 = arith.addf %52, %53 : vector<2x4xf32>
    %c0_28 = arith.constant 0 : index
    %c0_29 = arith.constant 0 : index
    %55 = vector.load %arg7[%c0_28, %c0_29] : memref<2x4xf32, #tpu.memory_space<vmem>>, vector<2x4xf32>
    tpu.vector_store %arg7[%c0_28, %c0_29], %54 {strides = array<i32>} : memref<2x4xf32, #tpu.memory_space<vmem>>, vector<2x4xf32>,
    return
  }
  func.func @transform_0(%arg0: i32) -> (i32, i32) {
    %c0_i32 = arith.constant 0 : i32
    %c0_i32_0 = arith.constant 0 : i32
    return %arg0, %c0_i32 : i32, i32
  }
  func.func @transform_1(%arg0: i32) -> (i32, i32) {
    %c0_i32 = arith.constant 0 : i32
    %c0_i32_0 = arith.constant 0 : i32
    %c0_i32_1 = arith.constant 0 : i32
    return %c0_i32, %c0_i32_0 : i32, i32
  }
  func.func @transform_2(%arg0: i32) -> (i32, i32) {
    %c0_i32 = arith.constant 0 : i32
    %c0_i32_0 = arith.constant 0 : i32
    %c0_i32_1 = arith.constant 0 : i32
    return %c0_i32, %c0_i32_0 : i32, i32
  }
  func.func @transform_3(%arg0: i32) -> (i32, i32) {
    %c0_i32 = arith.constant 0 : i32
    %c0_i32_0 = arith.constant 0 : i32
    %c0_i32_1 = arith.constant 0 : i32
    return %c0_i32, %c0_i32_0 : i32, i32
  }
  func.func @transform_4(%arg0: i32) -> (i32, i32) {
    %c0_i32 = arith.constant 0 : i32
    %c0_i32_0 = arith.constant 0 : i32
    %c0_i32_1 = arith.constant 0 : i32
    return %c0_i32, %c0_i32_0 : i32, i32
  }
  func.func @transform_5(%arg0: i32) -> (i32, i32) {
    %c0_i32 = arith.constant 0 : i32
    %c0_i32_0 = arith.constant 0 : i32
    return %arg0, %c0_i32 : i32, i32
  }
  func.func @transform_6(%arg0: i32) -> (i32, i32) {
    %c0_i32 = arith.constant 0 : i32
    %c0_i32_0 = arith.constant 0 : i32
    return %arg0, %c0_i32 : i32, i32
  }
  func.func @transform_7(%arg0: i32) -> (i32, i32) {
    %c0_i32 = arith.constant 0 : i32
    %c0_i32_0 = arith.constant 0 : i32
    return %arg0, %c0_i32 : i32, i32
  }
}

</mosaic_0001>

<llo_original>
// kernel: tpu_custom_call.1
$region0: #{tpu_custom_call.1}
  #allocation0 [shape = 'u32[]', space=smem, size = 0x4, offset = 0x4, fixed_abs, tag = 'smem constant byte address 0x4 - core index']
  #allocation1 [shape = 'u32[144,128]{1,0:T(1,128)}', space=vmem, size = 0x12000, scoped, tag = 'internal scratch']
  %s0 = inlined_call_operand.vmem [shape: f32[2,16], index: 0, kind: input, shape index: {}]
  %s1 = inlined_call_operand.hbm [shape: f32[16,32], index: 1, kind: input, shape index: {}]
  %s2 = inlined_call_operand.vmem [shape: f32[32,32], index: 2, kind: input, shape index: {}]
  %s3 = inlined_call_operand.vmem [shape: f32[32,8], index: 3, kind: input, shape index: {}]
  %s4 = inlined_call_operand.vmem [shape: f32[1,80], index: 4, kind: input, shape index: {}]
  %s5 = inlined_call_operand.vmem [shape: f32[2,4], index: 5, kind: input, shape index: {}]
  %s6 = inlined_call_operand.hbm [shape: f32[2,4], index: 6, kind: output, shape index: {0}]
  %s7 = inlined_call_operand.vmem [shape: f32[2,1], index: 7, kind: output, shape index: {1}]
  %8 = xla_tuple %s6, %s7
  %s9 = sld [smem:[#allocation0]]
  $region46: #{tpu_custom_call.1} parent=0
    _
  %s11 = ssub.s32 1, %s9
  %s12 = scalar_select 0, %s11, %s9
  $region1: #{tpu_custom_call.1} parent=0
    #allocation2 [shape = 'u8[8192]{0}', space=vmem, size = 0x2000, scoped, tag = 'input window, operand 1, single buffered']
    #allocation3 [shape = 's32[1]{0}', space=sflag, size = 0x4, scoped, tag = 'scoped memory for tpu_custom_call.1']
    #allocation4 [shape = 's32[1]{0}', space=sflag, size = 0x4, scoped, tag = 'scoped memory for tpu_custom_call.1']
    #allocation5 [shape = 'u8[1024]{0}', space=vmem, size = 0x400, scoped, tag = 'output window, operand 0, single buffered']
    %13 = vsyncpa [#allocation3], 0
    %14 = vsyncpa [#allocation4], 0
    // Predicated region
    $region2: #{tpu_custom_call.1} parent=1 // pred_check
      _
    $region3: #{tpu_custom_call.1} parent=1 // pred_check_branch
      %16 = sbr.rel (0) target = $region5
    $region4: #{tpu_custom_call.1} parent=1 // pred_region
      _
    $region5: #{tpu_custom_call.1} parent=1 // pred_fallthru
      _
    // Predicated region
    $region6: #{tpu_custom_call.1} parent=1 // pred_check
      _
    $region7: #{tpu_custom_call.1} parent=1 // pred_check_branch
      %18 = sbr.rel (0) target = $region9
    $region8: #{tpu_custom_call.1} parent=1 // pred_region
      %s20 = ssub.s32 256, 256
      %21 = vsyncadd [#allocation3], %s20
      %s22 = sshll.u32 [#allocation2], 4
      %s23 = int_to_ptr.vmem [resolvable:$true] %s22
      %28 = dma.hbm_to_vmem [thread:$0]  %s1, 256, %s23, [#allocation3], 128, 128, 8
    $region9: #{tpu_custom_call.1} parent=1 // pred_fallthru
      _
    // Predicated region
    $region10: #{tpu_custom_call.1} parent=1 // pred_check
      _
    $region11: #{tpu_custom_call.1} parent=1 // pred_check_branch
      %30 = sbr.rel (0) target = $region13
    $region12: #{tpu_custom_call.1} parent=1 // pred_region
      _
    $region13: #{tpu_custom_call.1} parent=1 // pred_fallthru
      _
    // Predicated region
    $region14: #{tpu_custom_call.1} parent=1 // pred_check
      _
    $region15: #{tpu_custom_call.1} parent=1 // pred_check_branch
      %32 = sbr.rel (0) target = $region17
    $region16: #{tpu_custom_call.1} parent=1 // pred_region
      _
    $region17: #{tpu_custom_call.1} parent=1 // pred_fallthru
      _
    // Predicated region
    $region18: #{tpu_custom_call.1} parent=1 // pred_check
      _
    $region19: #{tpu_custom_call.1} parent=1 // pred_check_branch
      %34 = sbr.rel (0) target = $region21
    $region20: #{tpu_custom_call.1} parent=1 // pred_region
      _
    $region21: #{tpu_custom_call.1} parent=1 // pred_fallthru
      _
    // Predicated region
    $region22: #{tpu_custom_call.1} parent=1 // pred_check
      _
    $region23: #{tpu_custom_call.1} parent=1 // pred_check_branch
      %36 = sbr.rel (0) target = $region25
    $region24: #{tpu_custom_call.1} parent=1 // pred_region
      _
    $region25: #{tpu_custom_call.1} parent=1 // pred_fallthru
      _
    // Predicated region
    $region26: #{tpu_custom_call.1} parent=1 // pred_check
      _
    $region27: #{tpu_custom_call.1} parent=1 // pred_check_branch
      %38 = sbr.rel (0) target = $region29
    $region28: #{tpu_custom_call.1} parent=1 // pred_region
      %39 = dma.done [#allocation3], 256
    $region29: #{tpu_custom_call.1} parent=1 // pred_fallthru
      _
    %v40 = vld [vmem:[%s5] sm:$0x3]
    %v41 = vld [vmem:[%s4] sm:$0x1]
    %v42 = vld [vmem:[%s0] sm:$0x3]
    %v43 = vld [vmem:[#allocation2] sm:$0xff]
    %v44 = vld [vmem:[#allocation2 + $0x8] sm:$0xff]
    %v46 = vlaneseq
    %v47 = vshrl.u32 %v46, 7
    %v48 = vsub.s32 0, %v47
    %v49 = vrot.slane %v41, %v48
    %vm51 = vcmask 130048
    %v53 = vsel %vm51, %v42, 0
    %55 = vmatprep.subr.mxu0 0.0
    %56 = vmatpush1.msra.mxu0 %v43
    %57 = vmatprep.subr.mxu0 0.0
    %58 = vmatpush1.msra.mxu0 %v44
    %59 = vmatprep.subr.mxu0 0.0
    %60 = vmatpush1.msra.mxu0 0.0
    %61 = vmatprep.subr.mxu0 0.0
    %62 = vmatpush1.msra.mxu0 0.0
    %63 = vmatprep.subr.mxu0 0.0
    %64 = vmatpush1.msra.mxu0 0.0
    %65 = vmatprep.subr.mxu0 0.0
    %66 = vmatpush1.msra.mxu0 0.0
    %67 = vmatprep.subr.mxu0 0.0
    %68 = vmatpush1.msra.mxu0 0.0
    %69 = vmatprep.subr.mxu0 0.0
    %70 = vmatpush1.msra.mxu0 0.0
    %71 = vmatprep.subr.mxu0 0.0
    %72 = vmatpush1.msra.mxu0 0.0
    %73 = vmatprep.subr.mxu0 0.0
    %74 = vmatpush1.msra.mxu0 0.0
    %75 = vmatprep.subr.mxu0 0.0
    %76 = vmatpush1.msra.mxu0 0.0
    %77 = vmatprep.subr.mxu0 0.0
    %78 = vmatpush1.msra.mxu0 0.0
    %79 = vmatprep.subr.mxu0 0.0
    %80 = vmatpush1.msra.mxu0 0.0
    %81 = vmatprep.subr.mxu0 0.0
    %82 = vmatpush1.msra.mxu0 0.0
    %83 = vmatprep.subr.mxu0 0.0
    %84 = vmatpush1.msra.mxu0 0.0
    %85 = vmatprep.subr.mxu0 0.0
    %86 = vmatpush1.msra.mxu0 0.0
    %87 = vmatprep.subr.mxu0 0.0
    %88 = vmatpush1.msra.mxu0 0.0
    %89 = vmatprep.subr.mxu0 0.0
    %90 = vmatpush1.msra.mxu0 0.0
    %91 = vmatprep.subr.mxu0 0.0
    %92 = vmatpush1.msra.mxu0 0.0
    %93 = vmatprep.subr.mxu0 0.0
    %94 = vmatpush1.msra.mxu0 0.0
    %95 = vmatprep.subr.mxu0 0.0
    %96 = vmatpush1.msra.mxu0 0.0
    %97 = vmatprep.subr.mxu0 0.0
    %98 = vmatpush1.msra.mxu0 0.0
    %99 = vmatprep.subr.mxu0 0.0
    %100 = vmatpush1.msra.mxu0 0.0
    %101 = vmatprep.subr.mxu0 0.0
    %102 = vmatpush1.msra.mxu0 0.0
    %103 = vmatprep.subr.mxu0 0.0
    %104 = vmatpush1.msra.mxu0 0.0
    %105 = vmatprep.subr.mxu0 0.0
    %106 = vmatpush1.msra.mxu0 0.0
    %107 = vmatprep.subr.mxu0 0.0
    %108 = vmatpush1.msra.mxu0 0.0
    %109 = vmatprep.subr.mxu0 0.0
    %110 = vmatpush1.msra.mxu0 0.0
    %111 = vmatprep.subr.mxu0 0.0
    %112 = vmatpush1.msra.mxu0 0.0
    %113 = vmatprep.subr.mxu0 0.0
    %114 = vmatpush1.msra.mxu0 0.0
    %115 = vmatprep.subr.mxu0 0.0
    %116 = vmatpush1.msra.mxu0 0.0
    %117 = vmatprep.subr.mxu0 0.0
    %118 = vmatpush1.msra.mxu0 0.0
    %119 = vmatprep.mubr.f32.mxu0 0.0
    %120 = vmatmul.mubr.f32.gmra.mrb[0].mxu0 %v53
    %v121 = vpop.f32.mrb[0].mxu0
    %v122 = vadd.f32 %v49, %v121
    %v123 = vpop.f32.mrb[0].mxu0
    %124 = vdwg.mxu0
    %v125 = vmax.f32 %v122, 0.0
    %v126 = vld [vmem:[%s2] sm:$0xff]
    %v127 = vld [vmem:[%s2 + $0x8] sm:$0xff]
    %v128 = vld [vmem:[%s2 + $0x10] sm:$0xff]
    %v129 = vld [vmem:[%s2 + $0x18] sm:$0xff]
    %130 = vrot.lane.b32.xlu0 %v49, 96
    %v131 = vpop.permute.xlu0 %130
    %vm133 = vcmask 261120
    %v135 = vsel %vm133, %v125, 0
    %137 = vmatprep.subr.mxu0 0.0
    %138 = vmatpush1.msra.mxu0 %v126
    %139 = vmatprep.subr.mxu0 0.0
    %140 = vmatpush1.msra.mxu0 %v127
    %141 = vmatprep.subr.mxu0 0.0
    %142 = vmatpush1.msra.mxu0 %v128
    %143 = vmatprep.subr.mxu0 0.0
    %144 = vmatpush1.msra.mxu0 %v129
    %145 = vmatprep.subr.mxu0 0.0
    %146 = vmatpush1.msra.mxu0 0.0
    %147 = vmatprep.subr.mxu0 0.0
    %148 = vmatpush1.msra.mxu0 0.0
    %149 = vmatprep.subr.mxu0 0.0
    %150 = vmatpush1.msra.mxu0 0.0
    %151 = vmatprep.subr.mxu0 0.0
    %152 = vmatpush1.msra.mxu0 0.0
    %153 = vmatprep.subr.mxu0 0.0
    %154 = vmatpush1.msra.mxu0 0.0
    %155 = vmatprep.subr.mxu0 0.0
    %156 = vmatpush1.msra.mxu0 0.0
    %157 = vmatprep.subr.mxu0 0.0
    %158 = vmatpush1.msra.mxu0 0.0
    %159 = vmatprep.subr.mxu0 0.0
    %160 = vmatpush1.msra.mxu0 0.0
    %161 = vmatprep.subr.mxu0 0.0
    %162 = vmatpush1.msra.mxu0 0.0
    %163 = vmatprep.subr.mxu0 0.0
    %164 = vmatpush1.msra.mxu0 0.0
    %165 = vmatprep.subr.mxu0 0.0
    %166 = vmatpush1.msra.mxu0 0.0
    %167 = vmatprep.subr.mxu0 0.0
    %168 = vmatpush1.msra.mxu0 0.0
    %169 = vmatprep.subr.mxu0 0.0
    %170 = vmatpush1.msra.mxu0 0.0
    %171 = vmatprep.subr.mxu0 0.0
    %172 = vmatpush1.msra.mxu0 0.0
    %173 = vmatprep.subr.mxu0 0.0
    %174 = vmatpush1.msra.mxu0 0.0
    %175 = vmatprep.subr.mxu0 0.0
    %176 = vmatpush1.msra.mxu0 0.0
    %177 = vmatprep.subr.mxu0 0.0
    %178 = vmatpush1.msra.mxu0 0.0
    %179 = vmatprep.subr.mxu0 0.0
    %180 = vmatpush1.msra.mxu0 0.0
    %181 = vmatprep.subr.mxu0 0.0
    %182 = vmatpush1.msra.mxu0 0.0
    %183 = vmatprep.subr.mxu0 0.0
    %184 = vmatpush1.msra.mxu0 0.0
    %185 = vmatprep.subr.mxu0 0.0
    %186 = vmatpush1.msra.mxu0 0.0
    %187 = vmatprep.subr.mxu0 0.0
    %188 = vmatpush1.msra.mxu0 0.0
    %189 = vmatprep.subr.mxu0 0.0
    %190 = vmatpush1.msra.mxu0 0.0
    %191 = vmatprep.subr.mxu0 0.0
    %192 = vmatpush1.msra.mxu0 0.0
    %193 = vmatprep.subr.mxu0 0.0
    %194 = vmatpush1.msra.mxu0 0.0
    %195 = vmatprep.subr.mxu0 0.0
    %196 = vmatpush1.msra.mxu0 0.0
    %197 = vmatprep.subr.mxu0 0.0
    %198 = vmatpush1.msra.mxu0 0.0
    %199 = vmatprep.subr.mxu0 0.0
    %200 = vmatpush1.msra.mxu0 0.0
    %201 = vmatprep.mubr.f32.mxu0 0.0
    %202 = vmatmul.mubr.f32.gmra.mrb[0].mxu0 %v135
    %v203 = vpop.f32.mrb[0].mxu0
    %v204 = vadd.f32 %v131, %v203
    %v205 = vpop.f32.mrb[0].mxu0
    %206 = vdwg.mxu0
    %v207 = vmax.f32 %v204, 0.0
    %v208 = vld [vmem:[%s3] sm:$0xff]
    %v209 = vld [vmem:[%s3 + $0x8] sm:$0xff]
    %v210 = vld [vmem:[%s3 + $0x10] sm:$0xff]
    %v211 = vld [vmem:[%s3 + $0x18] sm:$0xff]
    %212 = vrot.lane.b32.xlu0 %v49, 64
    %v213 = vpop.permute.xlu0 %212
    %v216 = vsel %vm133, %v207, 0
    %218 = vmatprep.subr.mxu0 0.0
    %219 = vmatpush1.msra.mxu0 %v208
    %220 = vmatprep.subr.mxu0 0.0
    %221 = vmatpush1.msra.mxu0 %v209
    %222 = vmatprep.subr.mxu0 0.0
    %223 = vmatpush1.msra.mxu0 %v210
    %224 = vmatprep.subr.mxu0 0.0
    %225 = vmatpush1.msra.mxu0 %v211
    %226 = vmatprep.subr.mxu0 0.0
    %227 = vmatpush1.msra.mxu0 0.0
    %228 = vmatprep.subr.mxu0 0.0
    %229 = vmatpush1.msra.mxu0 0.0
    %230 = vmatprep.subr.mxu0 0.0
    %231 = vmatpush1.msra.mxu0 0.0
    %232 = vmatprep.subr.mxu0 0.0
    %233 = vmatpush1.msra.mxu0 0.0
    %234 = vmatprep.subr.mxu0 0.0
    %235 = vmatpush1.msra.mxu0 0.0
    %236 = vmatprep.subr.mxu0 0.0
    %237 = vmatpush1.msra.mxu0 0.0
    %238 = vmatprep.subr.mxu0 0.0
    %239 = vmatpush1.msra.mxu0 0.0
    %240 = vmatprep.subr.mxu0 0.0
    %241 = vmatpush1.msra.mxu0 0.0
    %242 = vmatprep.subr.mxu0 0.0
    %243 = vmatpush1.msra.mxu0 0.0
    %244 = vmatprep.subr.mxu0 0.0
    %245 = vmatpush1.msra.mxu0 0.0
    %246 = vmatprep.subr.mxu0 0.0
    %247 = vmatpush1.msra.mxu0 0.0
    %248 = vmatprep.subr.mxu0 0.0
    %249 = vmatpush1.msra.mxu0 0.0
    %250 = vmatprep.subr.mxu0 0.0
    %251 = vmatpush1.msra.mxu0 0.0
    %252 = vmatprep.subr.mxu0 0.0
    %253 = vmatpush1.msra.mxu0 0.0
    %254 = vmatprep.subr.mxu0 0.0
    %255 = vmatpush1.msra.mxu0 0.0
    %256 = vmatprep.subr.mxu0 0.0
    %257 = vmatpush1.msra.mxu0 0.0
    %258 = vmatprep.subr.mxu0 0.0
    %259 = vmatpush1.msra.mxu0 0.0
    %260 = vmatprep.subr.mxu0 0.0
    %261 = vmatpush1.msra.mxu0 0.0
    %262 = vmatprep.subr.mxu0 0.0
    %263 = vmatpush1.msra.mxu0 0.0
    %264 = vmatprep.subr.mxu0 0.0
    %265 = vmatpush1.msra.mxu0 0.0
    %266 = vmatprep.subr.mxu0 0.0
    %267 = vmatpush1.msra.mxu0 0.0
    %268 = vmatprep.subr.mxu0 0.0
    %269 = vmatpush1.msra.mxu0 0.0
    %270 = vmatprep.subr.mxu0 0.0
    %271 = vmatpush1.msra.mxu0 0.0
    %272 = vmatprep.subr.mxu0 0.0
    %273 = vmatpush1.msra.mxu0 0.0
    %274 = vmatprep.subr.mxu0 0.0
    %275 = vmatpush1.msra.mxu0 0.0
    %276 = vmatprep.subr.mxu0 0.0
    %277 = vmatpush1.msra.mxu0 0.0
    %278 = vmatprep.subr.mxu0 0.0
    %279 = vmatpush1.msra.mxu0 0.0
    %280 = vmatprep.subr.mxu0 0.0
    %281 = vmatpush1.msra.mxu0 0.0
    %282 = vmatprep.mubr.f32.mxu0 0.0
    %283 = vmatmul.mubr.f32.gmra.mrb[0].mxu0 %v216
    %v284 = vpop.f32.mrb[0].mxu0
    %v285 = vadd.f32 %v213, %v284
    %v286 = vpop.f32.mrb[0].mxu0
    %287 = vdwg.mxu0
    %v288 = vmax.f32 %v285, -4.0
    %v289 = vmin.f32 %v288, 2.0
    %v290 = vmul.f32 %v289, 1.442695
    %v291 = vpow.pop %v290
    %293 = vrot.lane.b32.xlu0 %v40, 4
    %v294 = vpop.permute.xlu0 %293
    %v296 = vmul.f32 %v291, %v294
    %298 = vrot.lane.b32.xlu0 %v296, 124
    %v299 = vpop.permute.xlu0 %298
    %v301 = vadd.f32 %v285, %v299
    %v302 = vmul.f32 %v40, -0.5
    %v303 = vmul.f32 %v302, %v40
    %305 = vrot.lane.b32.xlu0 %v289, 124
    %v306 = vpop.permute.xlu0 %305
    %v308 = vsub.f32 %v303, %v306
    %v309 = vsub.f32 %v308, 1.4913034
    %v310 = vtanh.pop %v301
    %v311 = vmul.f32 %v310, %v310
    %v312 = vsub.f32 1.0, %v311
    %314 = vrot.lane.b32.xlu0 %v312, 72
    %v315 = vpop.permute.xlu0 %314
    %v317 = vmul.f32 %v49, %v315
    %v318 = vadd.f32 %v317, 1e-06
    %v319 = vlog2.pop %v318
    %v320 = vmul.f32 %v319, 0.6931472
    %322 = vrot.lane.b32.xlu0 %v320, 56
    %v323 = vpop.permute.xlu0 %322
    %v325 = vsub.f32 %v309, %v323
    %vm326 = vcmask 25600
    %v327 = vsel %vm326, %v325, 0.0
    %328 = vadd.xlane.f32.xlu0 %v327
    %v329 = vpop.xlane.xlu0 %328
    %vm330 = vcmask 1024
    %331 = vst.msk [vmem:[%s7] sm:$0x3] %vm330, %v329
    %332 = vrot.lane.b32.xlu0 %v49, 56
    %v333 = vpop.permute.xlu0 %332
    %v335 = vmul.f32 %v310, %v333
    %336 = vrot.lane.b32.xlu0 %v49, 52
    %v337 = vpop.permute.xlu0 %336
    %v339 = vadd.f32 %v335, %v337
    %340 = vst.msk [vmem:[#allocation5] sm:$0x3] %vm326, %v339
    // Predicated region
    $region30: #{tpu_custom_call.1} parent=1 // pred_check
      _
    $region31: #{tpu_custom_call.1} parent=1 // pred_check_branch
      %342 = sbr.rel (0) target = $region33
    $region32: #{tpu_custom_call.1} parent=1 // pred_region
      %s344 = ssub.s32 32, 32
      %345 = vsyncadd [#allocation4], %s344
      %s347 = sshll.u32 [#allocation5], 4
      %s348 = int_to_ptr.vmem [resolvable:$true] %s347
      %350 = dma.vmem_to_hbm [thread:$0]  %s348, 32, %s6, [#allocation4]
    $region33: #{tpu_custom_call.1} parent=1 // pred_fallthru
      _
    // Predicated region
    $region34: #{tpu_custom_call.1} parent=1 // pred_check
      _
    $region35: #{tpu_custom_call.1} parent=1 // pred_check_branch
      %352 = sbr.rel (0) target = $region37
    $region36: #{tpu_custom_call.1} parent=1 // pred_region
      _
    $region37: #{tpu_custom_call.1} parent=1 // pred_fallthru
      _
    // Predicated region
    $region38: #{tpu_custom_call.1} parent=1 // pred_check
      _
    $region39: #{tpu_custom_call.1} parent=1 // pred_check_branch
      %354 = sbr.rel (0) target = $region41
    $region40: #{tpu_custom_call.1} parent=1 // pred_region
      %355 = dma.done [#allocation4], 32
    $region41: #{tpu_custom_call.1} parent=1 // pred_fallthru
      _
    // Predicated region
    $region42: #{tpu_custom_call.1} parent=1 // pred_check
      _
    $region43: #{tpu_custom_call.1} parent=1 // pred_check_branch
      %357 = sbr.rel (0) target = $region45
    $region44: #{tpu_custom_call.1} parent=1 // pred_region
      _
    $region45: #{tpu_custom_call.1} parent=1 // pred_fallthru
      _
    %358 = vsyncpa [#allocation3], 1
    %359 = vsyncpa [#allocation4], 1

</llo_original>
